<compile_context>
chip_gen: v6e
topology: v6e:2x2x1
jax: 0.10.0
libtpu: 0.0.40
codegen_flags: <defaults>
</compile_context>

<pallas_src>
import functools

import jax
import jax.numpy as jnp
from jax.experimental import pallas as pl
from jax.experimental.pallas import tpu as pltpu


_TARGET_BLOCK_BYTES = 2 * 1024 * 1024   # ~2 MiB/block -> <=8 MiB resident (in+out, 2x buffered)
_SUBLANE = {4: 8, 2: 16, 1: 32}          # sublane packing: f32 / bf16 / int8-fp8
_BYPASS_BYTES = 256 * 1024               # below this, pallas_call overhead > data movement


def _add_channel0_kernel(x_ref, o_ref, *, amount):
    # x_ref / o_ref: VMEM tiles covering channel 0 only.
    o_ref[...] = x_ref[...] + jnp.asarray(amount, dtype=x_ref.dtype)


def _pick_lane_layout(h: int, w: int) -> tuple[int, int]:
    """Flatten H*W to (rows, lanes) with lanes as wide / 128-aligned as possible."""
    hw = h * w
    if hw % 128 == 0:
        return hw // 128, 128            # unmasked full-width stores
    # 128 does not divide hw, so no divisor is a multiple of 128; take the
    # widest divisor in [128, 512] to minimize masked lanes, else keep (h, w).
    for d in range(min(hw, 512), 127, -1):
        if hw % d == 0:
            return hw // d, d
    return h, w


def _add_conservative_impl(x: jax.Array, amount, force_pallas=False) -> jax.Array:
    """x: (N, C, H, W). Returns x with `amount` added to channel 0 only.

    NOTE: x is aliased into the output (in-place update; caller donates x).
    If donation fails, XLA inserts a full copy first — still correct, but the
    traffic savings are void."""
    n, c, h, w = x.shape
    itemsize = jnp.dtype(x.dtype).itemsize
    ch0_bytes = n * h * w * itemsize

    # Tiny channel-0 slab: the fixed pallas_call + reshape overhead exceeds
    # the data movement; a donated in-place update is faster.
    if not force_pallas and ch0_bytes < _BYPASS_BYTES:
        return x.at[:, :1].add(jnp.asarray(amount, dtype=x.dtype))

    rows, lanes = _pick_lane_layout(h, w)
    sublane = _SUBLANE.get(itemsize, 8)
    slab_bytes = rows * lanes * itemsize              # per-batch channel-0 bytes
    x4 = x.reshape(n, c, rows, lanes)                 # row-major bitcast reshape

    if n > 1 and slab_bytes <= _TARGET_BLOCK_BYTES // 2:
        # Small per-batch slab: pack several batches' channel-0 slabs per
        # block to amortize per-grid-step overhead (rectangular 4D DMA).
        bn = max(1, min(n, _TARGET_BLOCK_BYTES // max(slab_bytes, 1)))
        grid = (pl.cdiv(n, bn),)
        block = (bn, 1, rows, lanes)
        index_map = lambda i: (i, 0, 0, 0)
        semantics = ("parallel",)
    else:
        # Fixed ~2 MiB row tile, cdiv grid; Pallas masks the ragged last block.
        max_rows = max(1, _TARGET_BLOCK_BYTES // (lanes * itemsize))
        if rows <= max_rows:
            row_tile = rows                            # full extent (always legal)
        else:
            row_tile = max(sublane, (max_rows // sublane) * sublane)
        # v7x megacore: with a single batch, expose >= 2 grid steps so both
        # TensorCores stream HBM (no-op on single-TC v5e/v6e).
        if n == 1 and row_tile == rows and rows >= 2 * sublane:
            half = -(-rows // 2)
            row_tile = (-(-half // sublane)) * sublane
        n_tiles = pl.cdiv(rows, row_tile)
        grid = (n, n_tiles)
        block = (1, 1, row_tile, lanes)
        index_map = lambda b, s: (b, 0, s, 0)
        semantics = ("parallel", "parallel")

    kernel = functools.partial(_add_channel0_kernel, amount=amount)
    out4 = pl.pallas_call(
        kernel,
        out_shape=jax.ShapeDtypeStruct((n, c, rows, lanes), x.dtype),
        grid=grid,
        in_specs=[pl.BlockSpec(block, index_map)],
        out_specs=pl.BlockSpec(block, index_map),
        input_output_aliases={0: 0},      # channels 1..C-1 pass through in place
        cost_estimate=pl.CostEstimate(
            flops=n * rows * lanes,
            transcendentals=0,
            bytes_accessed=2 * n * rows * lanes * itemsize,
        ),
        compiler_params=pltpu.CompilerParams(dimension_semantics=semantics),
    )(x4)
    return out4.reshape(n, c, h, w)


# `amount` and `force_pallas` are static; x is donated so the channel-0 update
# is truly in place (no full-tensor copy, no streaming of the other channels).
add_conservative = jax.jit(
    _add_conservative_impl, static_argnums=(1, 2), donate_argnums=0
)


if __name__ == "__main__":
    amount = 1.5  # the module's __init__ hyperparameter
    k1, k2 = jax.random.split(jax.random.PRNGKey(0))

    # Case 1: lane-dense path (H*W % 128 == 0), batch-tiled blocks.
    x1 = jax.random.normal(k1, (2, 4, 16, 16), dtype=jnp.float32)
    # Reference computed (and materialized) BEFORE the call: x1 is donated.
    ref1 = jax.block_until_ready(
        jnp.concatenate([x1[:, :1] + amount, x1[:, 1:]], axis=1))
    out1 = jax.block_until_ready(add_conservative(x1, amount, True))
    assert out1.shape == (2, 4, 16, 16) and out1.dtype == jnp.float32
    assert jnp.allclose(out1, ref1, atol=1e-6), "case 1 mismatch vs reference"

    # Case 2: H*W not divisible by 128 -> widest-divisor lane fallback (480).
    x2 = jax.random.normal(k2, (2, 3, 24, 40), dtype=jnp.float32)
    ref2 = jax.block_until_ready(
        jnp.concatenate([x2[:, :1] + amount, x2[:, 1:]], axis=1))
    out2 = jax.block_until_ready(add_conservative(x2, amount, True))
    assert out2.shape == (2, 3, 24, 40) and out2.dtype == jnp.float32
    assert jnp.allclose(out2, ref2, atol=1e-6), "case 2 mismatch vs reference"

    print("KERNEL_OK")
</pallas_src>

<mosaic_0001>
module attributes {stable_mosaic.version = 11 : i64} {
  func.func @_add_channel0_kernel(%arg0: i32, %arg1: memref<2x1x2x128xf32, #tpu.memory_space<vmem>>, %arg2: memref<2x1x2x128xf32, #tpu.memory_space<vmem>>) attributes {dimension_semantics = [#tpu.dimension_semantics<parallel>], iteration_bounds = array<i64: 1>, scalar_prefetch = 0 : i64, scratch_operands = 0 : i64, tpu.core_type = #tpu.core_type<tc>, window_params = [{transform_indices = @transform_0, window_bounds = array<i64: 2, 1, 2, 128>}, {transform_indices = @transform_1, window_bounds = array<i64: 2, 1, 2, 128>}]} {
    %c0 = arith.constant 0 : index
    %c0_0 = arith.constant 0 : index
    %c0_1 = arith.constant 0 : index
    %c0_2 = arith.constant 0 : index
    %0 = vector.load %arg1[%c0, %c0_0, %c0_1, %c0_2] : memref<2x1x2x128xf32, #tpu.memory_space<vmem>>, vector<2x1x2x128xf32>
    %cst = arith.constant 1.500000e+00 : f32
    %1 = vector.broadcast %cst : f32 to vector<2x1x2x128xf32>
    %2 = arith.addf %0, %1 : vector<2x1x2x128xf32>
    %c0_3 = arith.constant 0 : index
    %c0_4 = arith.constant 0 : index
    %c0_5 = arith.constant 0 : index
    %c0_6 = arith.constant 0 : index
    %3 = vector.load %arg2[%c0_3, %c0_4, %c0_5, %c0_6] : memref<2x1x2x128xf32, #tpu.memory_space<vmem>>, vector<2x1x2x128xf32>
    tpu.vector_store %arg2[%c0_3, %c0_4, %c0_5, %c0_6], %2 {strides = array<i32>} : memref<2x1x2x128xf32, #tpu.memory_space<vmem>>, vector<2x1x2x128xf32>,
    return
  }
  func.func @transform_0(%arg0: i32) -> (i32, i32, i32, i32) {
    %c0_i32 = arith.constant 0 : i32
    %c0_i32_0 = arith.constant 0 : i32
    %c0_i32_1 = arith.constant 0 : i32
    %c0_i32_2 = arith.constant 0 : i32
    return %arg0, %c0_i32, %c0_i32_0, %c0_i32_1 : i32, i32, i32, i32
  }
  func.func @transform_1(%arg0: i32) -> (i32, i32, i32, i32) {
    %c0_i32 = arith.constant 0 : i32
    %c0_i32_0 = arith.constant 0 : i32
    %c0_i32_1 = arith.constant 0 : i32
    %c0_i32_2 = arith.constant 0 : i32
    return %arg0, %c0_i32, %c0_i32_0, %c0_i32_1 : i32, i32, i32, i32
  }
}

</mosaic_0001>

<llo_original>
// kernel: _add_conservative_impl.1
$region0: #{_add_conservative_impl.1}
  #allocation0 [shape = 'u32[]', space=smem, size = 0x4, offset = 0x4, fixed_abs, tag = 'smem constant byte address 0x4 - core index']
  #allocation1 [shape = 'u32[144,128]{1,0:T(1,128)}', space=vmem, size = 0x12000, scoped, tag = 'internal scratch']
  %s0 = inlined_call_operand.vmem [shape: f32[2,4,2,128], index: 0, kind: input, shape index: {}, may-alias: {0,1}]
  %s1 = inlined_call_operand.vmem [shape: f32[2,4,2,128], index: 1, kind: output, shape index: {}, may-alias: {0,1}]
  %s2 = sld [smem:[#allocation0]]
  $region78: #{_add_conservative_impl.1} parent=0
    _
  %s4 = ssub.s32 1, %s2
  %s5 = scalar_select 0, %s4, %s2
  $region1: #{_add_conservative_impl.1} parent=0
    #allocation2 [shape = 'u8[2048]{0}', space=vmem, size = 0x800, scoped, tag = 'input window, operand 0, single buffered']
    #allocation3 [shape = 'u8[2048]{0}', space=vmem, size = 0x800, scoped, tag = 'output window, operand 0, single buffered']
    // Predicated region
    $region2: #{_add_conservative_impl.1} parent=1 // pred_check
      _
    $region3: #{_add_conservative_impl.1} parent=1 // pred_check_branch
      %7 = sbr.rel (0) target = $region5
    $region4: #{_add_conservative_impl.1} parent=1 // pred_region
      // Predicated region
      $region6: #{_add_conservative_impl.1} parent=4 // pred_check
        _
      $region7: #{_add_conservative_impl.1} parent=4 // pred_check_branch
        %9 = sbr.rel (0) target = $region9
      $region8: #{_add_conservative_impl.1} parent=4 // pred_region
        // Predicated region
        $region10: #{_add_conservative_impl.1} parent=8 // pred_check
          _
        $region11: #{_add_conservative_impl.1} parent=8 // pred_check_branch
          %11 = sbr.rel target = $region13
        $region12: #{_add_conservative_impl.1} parent=8 // pred_region
          // Predicated region
          $region25: #{_add_conservative_impl.1} parent=12 // pred_check
            _
          $region26: #{_add_conservative_impl.1} parent=12 // pred_check_branch
            %29 = sbr.rel (0) target = $region28
          $region27: #{_add_conservative_impl.1} parent=12 // pred_region
            %s31 = ssub.s32 4, 1
            loop: start=0, step=1, limit=1
            $region29: #{_add_conservative_impl.1} parent=27 // loop_pre_header
              _
            $region30: #{_add_conservative_impl.1} parent=27 // loop_header
              %s33 = sphi 0, %s37
              %p34 = scmp.ge.s32.totalorder %s33, 1
              %s38 = sphi %s0, %s0
              %s39 = sphi [#allocation2], [#allocation2]
            $region31: #{_add_conservative_impl.1} parent=27 // loop_header_branch
              %36 = sbr.rel (%p34) target = $region35
            $region32: #{_add_conservative_impl.1} parent=27 // loop_body
              %v40 = vld [vmem:[%s38] sm:%s31]
              %41 = vst [vmem:[%s39] sm:%s31] %v40
              %v42 = vld [vmem:[%s38 + $0x8] sm:%s31]
              %43 = vst [vmem:[%s39 + $0x2] sm:%s31] %v42
            $region33: #{_add_conservative_impl.1} parent=27 // loop_footer
              %s37 = sadd.s32 1, %s33
            $region34: #{_add_conservative_impl.1} parent=27 // loop_footer_branch
              %32 = sbr.rel target = $region30
            $region35: #{_add_conservative_impl.1} parent=27 // loop_exit
              _
          $region28: #{_add_conservative_impl.1} parent=12 // pred_fallthru
            _
        $region13: #{_add_conservative_impl.1} parent=8 // pred_fallthru
          _
        // Predicated region
        $region14: #{_add_conservative_impl.1} parent=8 // pred_check
          _
        $region15: #{_add_conservative_impl.1} parent=8 // pred_check_branch
          %13 = sbr.rel (0) target = $region17
        $region16: #{_add_conservative_impl.1} parent=8 // pred_region
          %s15 = ssub.s32 4, 1
          loop: start=0, step=1, limit=1
          $region18: #{_add_conservative_impl.1} parent=16 // loop_pre_header
            _
          $region19: #{_add_conservative_impl.1} parent=16 // loop_header
            %s17 = sphi 0, %s21
            %p18 = scmp.ge.s32.totalorder %s17, 1
            %s22 = sphi %s0, %s0
            %s23 = sphi [#allocation2], [#allocation2]
          $region20: #{_add_conservative_impl.1} parent=16 // loop_header_branch
            %20 = sbr.rel (%p18) target = $region24
          $region21: #{_add_conservative_impl.1} parent=16 // loop_body
            %v24 = vld [vmem:[%s22] sm:%s15]
            %25 = vst [vmem:[%s23] sm:%s15] %v24
            %v26 = vld [vmem:[%s22 + $0x8] sm:%s15]
            %27 = vst [vmem:[%s23 + $0x2] sm:%s15] %v26
          $region22: #{_add_conservative_impl.1} parent=16 // loop_footer
            %s21 = sadd.s32 1, %s17
          $region23: #{_add_conservative_impl.1} parent=16 // loop_footer_branch
            %16 = sbr.rel target = $region19
          $region24: #{_add_conservative_impl.1} parent=16 // loop_exit
            _
        $region17: #{_add_conservative_impl.1} parent=8 // pred_fallthru
          _
      $region9: #{_add_conservative_impl.1} parent=4 // pred_fallthru
        _
      %44 = vnop
    $region5: #{_add_conservative_impl.1} parent=1 // pred_fallthru
      _
    // Predicated region
    $region36: #{_add_conservative_impl.1} parent=1 // pred_check
      _
    $region37: #{_add_conservative_impl.1} parent=1 // pred_check_branch
      %46 = sbr.rel (0) target = $region39
    $region38: #{_add_conservative_impl.1} parent=1 // pred_region
      _
    $region39: #{_add_conservative_impl.1} parent=1 // pred_fallthru
      _
    %v47 = vld [vmem:[#allocation2] sm:$0x3]
    %v48 = vld [vmem:[#allocation2 + $0x2] sm:$0x3]
    %v49 = vadd.f32 %v47, 1.5
    %v50 = vadd.f32 %v48, 1.5
    %51 = vst [vmem:[#allocation3] sm:$0x3] %v49
    %52 = vst [vmem:[#allocation3 + $0x2] sm:$0x3] %v50
    // Predicated region
    $region40: #{_add_conservative_impl.1} parent=1 // pred_check
      _
    $region41: #{_add_conservative_impl.1} parent=1 // pred_check_branch
      %54 = sbr.rel (0) target = $region43
    $region42: #{_add_conservative_impl.1} parent=1 // pred_region
      // Predicated region
      $region44: #{_add_conservative_impl.1} parent=42 // pred_check
        _
      $region45: #{_add_conservative_impl.1} parent=42 // pred_check_branch
        %56 = sbr.rel (0) target = $region47
      $region46: #{_add_conservative_impl.1} parent=42 // pred_region
        // Predicated region
        $region48: #{_add_conservative_impl.1} parent=46 // pred_check
          _
        $region49: #{_add_conservative_impl.1} parent=46 // pred_check_branch
          %58 = sbr.rel target = $region51
        $region50: #{_add_conservative_impl.1} parent=46 // pred_region
          // Predicated region
          $region63: #{_add_conservative_impl.1} parent=50 // pred_check
            _
          $region64: #{_add_conservative_impl.1} parent=50 // pred_check_branch
            %76 = sbr.rel (0) target = $region66
          $region65: #{_add_conservative_impl.1} parent=50 // pred_region
            %s78 = ssub.s32 4, 1
            loop: start=0, step=1, limit=1
            $region67: #{_add_conservative_impl.1} parent=65 // loop_pre_header
              _
            $region68: #{_add_conservative_impl.1} parent=65 // loop_header
              %s80 = sphi 0, %s84
              %p81 = scmp.ge.s32.totalorder %s80, 1
              %s85 = sphi [#allocation3], [#allocation3]
              %s86 = sphi %s1, %s1
            $region69: #{_add_conservative_impl.1} parent=65 // loop_header_branch
              %83 = sbr.rel (%p81) target = $region73
            $region70: #{_add_conservative_impl.1} parent=65 // loop_body
              %v87 = vld [vmem:[%s85] sm:%s78]
              %88 = vst [vmem:[%s86] sm:%s78] %v87
              %v89 = vld [vmem:[%s85 + $0x2] sm:%s78]
              %90 = vst [vmem:[%s86 + $0x8] sm:%s78] %v89
            $region71: #{_add_conservative_impl.1} parent=65 // loop_footer
              %s84 = sadd.s32 1, %s80
            $region72: #{_add_conservative_impl.1} parent=65 // loop_footer_branch
              %79 = sbr.rel target = $region68
            $region73: #{_add_conservative_impl.1} parent=65 // loop_exit
              _
          $region66: #{_add_conservative_impl.1} parent=50 // pred_fallthru
            _
        $region51: #{_add_conservative_impl.1} parent=46 // pred_fallthru
          _
        // Predicated region
        $region52: #{_add_conservative_impl.1} parent=46 // pred_check
          _
        $region53: #{_add_conservative_impl.1} parent=46 // pred_check_branch
          %60 = sbr.rel (0) target = $region55
        $region54: #{_add_conservative_impl.1} parent=46 // pred_region
          %s62 = ssub.s32 4, 1
          loop: start=0, step=1, limit=1
          $region56: #{_add_conservative_impl.1} parent=54 // loop_pre_header
            _
          $region57: #{_add_conservative_impl.1} parent=54 // loop_header
            %s64 = sphi 0, %s68
            %p65 = scmp.ge.s32.totalorder %s64, 1
            %s69 = sphi [#allocation3], [#allocation3]
            %s70 = sphi %s1, %s1
          $region58: #{_add_conservative_impl.1} parent=54 // loop_header_branch
            %67 = sbr.rel (%p65) target = $region62
          $region59: #{_add_conservative_impl.1} parent=54 // loop_body
            %v71 = vld [vmem:[%s69] sm:%s62]
            %72 = vst [vmem:[%s70] sm:%s62] %v71
            %v73 = vld [vmem:[%s69 + $0x2] sm:%s62]
            %74 = vst [vmem:[%s70 + $0x8] sm:%s62] %v73
          $region60: #{_add_conservative_impl.1} parent=54 // loop_footer
            %s68 = sadd.s32 1, %s64
          $region61: #{_add_conservative_impl.1} parent=54 // loop_footer_branch
            %63 = sbr.rel target = $region57
          $region62: #{_add_conservative_impl.1} parent=54 // loop_exit
            _
        $region55: #{_add_conservative_impl.1} parent=46 // pred_fallthru
          _
      $region47: #{_add_conservative_impl.1} parent=42 // pred_fallthru
        _
      %91 = vnop
    $region43: #{_add_conservative_impl.1} parent=1 // pred_fallthru
      _
    // Predicated region
    $region74: #{_add_conservative_impl.1} parent=1 // pred_check
      _
    $region75: #{_add_conservative_impl.1} parent=1 // pred_check_branch
      %93 = sbr.rel (0) target = $region77
    $region76: #{_add_conservative_impl.1} parent=1 // pred_region
      _
    $region77: #{_add_conservative_impl.1} parent=1 // pred_fallthru
      _

</llo_original>
